<compile_context>
chip_gen: v7x
topology: tpu7x:2x2x1
jax: 0.10.0
libtpu: 0.0.40
codegen_flags: <defaults>
</compile_context>

<pallas_src>
import functools

import jax
import jax.numpy as jnp
from jax.experimental import pallas as pl
from jax.experimental.pallas import tpu as pltpu


def _sigmoid_full_vreg(x):
    # Mathematically exact sigmoid via tanh: one EUP issue on the full vreg,
    # instead of a (possibly exp + reciprocal) logistic per 32-lane gate slice.
    return 0.5 * (jnp.tanh(0.5 * x) + 1.0)


def _lstm_kernel(x_ref, wi_ref, wh_ref, b_ref, out_ref, c_ref,
                 *, seq, batch, hidden):
    """Single-invocation LSTM kernel (whole sequence resident in VMEM).

    x_ref   : (S*B, I)    inputs for all timesteps, row t*B + b == x[t, b]
    wi_ref  : (I, 4H)     input weights
    wh_ref  : (H, 4H)     recurrent weights
    b_ref   : (1, 4H)     bias
    out_ref : (B, S*H)    lane-dense output slab; out[:, t*H:(t+1)*H] = h_t
    c_ref   : (B, H)      final cell state
    """
    S, B, H = seq, batch, hidden

    # ---- Prologue: one big MXU matmul for ALL timesteps, bias folded in. ----
    pre = (
        jnp.dot(x_ref[...], wi_ref[...], preferred_element_type=jnp.float32)
        + b_ref[...]
    )  # (S*B, 4H)

    wh = wh_ref[...]  # hoisted: resident recurrent weights, read once

    h = jnp.zeros((B, H), jnp.float32)
    c = jnp.zeros((B, H), jnp.float32)
    hs = []

    # ---- Statically unrolled recurrence: per step only h @ Wh + gate math. ----
    for t in range(S):
        gates = pre[t * B:(t + 1) * B, :] + jnp.dot(
            h, wh, preferred_element_type=jnp.float32
        )  # (B, 4H)

        # One full-vreg sigmoid (the g columns are computed-but-unused: they
        # ride along in the same (8,128) vreg, so they are free).
        sig = _sigmoid_full_vreg(gates)
        i_g = sig[:, 0 * H:1 * H]
        f_g = sig[:, 1 * H:2 * H]
        o_g = sig[:, 3 * H:4 * H]
        g_g = jnp.tanh(gates[:, 2 * H:3 * H])

        c = f_g * c + i_g * g_g
        h = o_g * jnp.tanh(c)
        hs.append(h)

    # ---- Single lane-dense store of the whole (B, S*H) output slab. ----
    out_ref[...] = jnp.concatenate(hs, axis=1)
    c_ref[...] = c


def chaotic_lstm_forward(x, Wi, Wh, B):
    """x: (seq, batch, input_size) float32. Returns (output, (ht, ct)) with
    output: (batch, seq, hidden), ht/ct: (batch, hidden) — matching PyTorch."""
    S, bs, I = x.shape
    H4 = Wi.shape[1]
    H = H4 // 4

    # Free row-major reshapes in the wrapper (no data movement).
    x2d = x.reshape(S * bs, I)
    b2d = B.reshape(1, H4)

    kernel = functools.partial(_lstm_kernel, seq=S, batch=bs, hidden=H)

    # Explicit VMEM budget from the actual resident buffers (inputs + outputs
    # + the (S*B, 4H) gate pre-activation intermediate), with headroom, capped
    # strictly below the device's physical VMEM (v7x has only 64 MiB/TC).
    itemsize = 4
    resident = itemsize * (
        x2d.size + Wi.size + Wh.size + b2d.size          # inputs
        + bs * S * H + bs * H                            # outputs
        + S * bs * H4                                    # pre-activations
    )
    try:
        phys_vmem = int(pltpu.get_tpu_info().vmem_capacity_bytes)
    except Exception:
        phys_vmem = 64 * 1024 * 1024                     # v7x-safe fallback
    vmem_cap = (3 * phys_vmem) // 4
    vmem_limit = int(min(vmem_cap, max(4 * 1024 * 1024, 4 * resident)))

    out_flat, ct = pl.pallas_call(
        kernel,
        out_shape=(
            jax.ShapeDtypeStruct((bs, S * H), jnp.float32),  # per-step hidden (flat)
            jax.ShapeDtypeStruct((bs, H), jnp.float32),      # final c
        ),
        grid_spec=pltpu.PrefetchScalarGridSpec(
            num_scalar_prefetch=0,
            grid=(1,),
            in_specs=[
                pl.BlockSpec((S * bs, I), lambda i: (0, 0)),  # x (all steps)
                pl.BlockSpec((I, H4), lambda i: (0, 0)),      # Wi
                pl.BlockSpec((H, H4), lambda i: (0, 0)),      # Wh
                pl.BlockSpec((1, H4), lambda i: (0, 0)),      # bias
            ],
            out_specs=[
                pl.BlockSpec((bs, S * H), lambda i: (0, 0)),  # output slab
                pl.BlockSpec((bs, H), lambda i: (0, 0)),      # ct
            ],
        ),
        compiler_params=pltpu.CompilerParams(
            dimension_semantics=("arbitrary",),
            vmem_limit_bytes=vmem_limit,
        ),
    )(x2d, Wi, Wh, b2d)

    # Free reshape: (B, S*H) -> (B, S, H); no transpose, no extra HBM traffic.
    output = out_flat.reshape(bs, S, H)
    # ht is identical to the last timestep's hidden slice — no separate kernel
    # output / masked store needed.
    ht = out_flat[:, (S - 1) * H:]
    return output, (ht, ct)


def _reference_lstm(x, Wi, Wh, B):
    """Pure-JAX reference replicating the PyTorch forward (chaotic=False)."""
    S, bs, _ = x.shape
    H = Wi.shape[1] // 4
    h = jnp.zeros((bs, H), jnp.float32)
    c = jnp.zeros((bs, H), jnp.float32)
    outs = []
    for t in range(S):
        gates = x[t] @ Wi + h @ Wh + B
        i = jax.nn.sigmoid(gates[:, :H])
        f = jax.nn.sigmoid(gates[:, H:2 * H])
        g = jnp.tanh(gates[:, 2 * H:3 * H])
        o = jax.nn.sigmoid(gates[:, 3 * H:])
        c = f * c + i * g
        h = o * jnp.tanh(c)
        outs.append(h[:, None, :])
    return jnp.concatenate(outs, axis=1), (h, c)


if __name__ == "__main__":
    # Small shapes consistent with the module: seq=8, batch=8, input=16, hidden=32.
    seq, batch, input_size, hidden = 8, 8, 16, 32

    key = jax.random.PRNGKey(0)
    kx, kwi, kwh, kb = jax.random.split(key, 4)

    std = 1.0 / jnp.sqrt(jnp.float32(hidden))
    x = jax.random.normal(kx, (seq, batch, input_size), dtype=jnp.float32)
    Wi = jax.random.uniform(kwi, (input_size, hidden * 4), jnp.float32, -std, std)
    Wh = jax.random.uniform(kwh, (hidden, hidden * 4), jnp.float32, -std, std)
    B = jax.random.uniform(kb, (hidden * 4,), jnp.float32, -std, std)

    output, (ht, ct) = chaotic_lstm_forward(x, Wi, Wh, B)
    jax.block_until_ready((output, ht, ct))

    # Correctness check against pure-JAX reference.
    ref_out, (ref_h, ref_c) = _reference_lstm(x, Wi, Wh, B)
    assert output.shape == (batch, seq, hidden)
    assert ht.shape == (batch, hidden) and ct.shape == (batch, hidden)
    assert jnp.allclose(output, ref_out, atol=1e-5, rtol=1e-5)
    assert jnp.allclose(ht, ref_h, atol=1e-5, rtol=1e-5)
    assert jnp.allclose(ct, ref_c, atol=1e-5, rtol=1e-5)

    print("KERNEL_OK")
</pallas_src>

<mosaic_0001>
module attributes {stable_mosaic.version = 11 : i64} {
  func.func @_lstm_kernel(%arg0: i32, %arg1: memref<64x16xf32, #tpu.memory_space<vmem>>, %arg2: memref<16x128xf32, #tpu.memory_space<vmem>>, %arg3: memref<32x128xf32, #tpu.memory_space<vmem>>, %arg4: memref<1x128xf32, #tpu.memory_space<vmem>>, %arg5: memref<8x256xf32, #tpu.memory_space<vmem>>, %arg6: memref<8x32xf32, #tpu.memory_space<vmem>>) attributes {dimension_semantics = [#tpu.dimension_semantics<arbitrary>], iteration_bounds = array<i64: 1>, scalar_prefetch = 0 : i64, scratch_operands = 0 : i64, tpu.core_type = #tpu.core_type<tc>, window_params = [{pipeline_mode = #tpu.pipeline_mode<synchronous>, transform_indices = @transform_0, window_bounds = array<i64: 64, 16>}, {pipeline_mode = #tpu.pipeline_mode<synchronous>, transform_indices = @transform_1, window_bounds = array<i64: 16, 128>}, {pipeline_mode = #tpu.pipeline_mode<synchronous>, transform_indices = @transform_2, window_bounds = array<i64: 32, 128>}, {pipeline_mode = #tpu.pipeline_mode<synchronous>, transform_indices = @transform_3, window_bounds = array<i64: 1, 128>}, {pipeline_mode = #tpu.pipeline_mode<synchronous>, transform_indices = @transform_4, window_bounds = array<i64: 8, 256>}, {pipeline_mode = #tpu.pipeline_mode<synchronous>, transform_indices = @transform_5, window_bounds = array<i64: 8, 32>}]} {
    %c0 = arith.constant 0 : index
    %c0_0 = arith.constant 0 : index
    %0 = vector.load %arg1[%c0, %c0_0] : memref<64x16xf32, #tpu.memory_space<vmem>>, vector<64x16xf32>
    %c0_1 = arith.constant 0 : index
    %c0_2 = arith.constant 0 : index
    %1 = vector.load %arg2[%c0_1, %c0_2] : memref<16x128xf32, #tpu.memory_space<vmem>>, vector<16x128xf32>
    %cst = arith.constant dense<0.000000e+00> : vector<64x128xf32>
    %2 = tpu.matmul %0, %1, %cst {dimension_numbers = #tpu.dot_dimension_numbers<[1], [0], [0], [1], [0, 0, 1, 1], [], []>} : vector<64x16xf32>, vector<16x128xf32>, vector<64x128xf32> -> vector<64x128xf32>
    %c0_3 = arith.constant 0 : index
    %c0_4 = arith.constant 0 : index
    %3 = vector.load %arg4[%c0_3, %c0_4] : memref<1x128xf32, #tpu.memory_space<vmem>>, vector<1x128xf32>
    %4 = vector.broadcast %3 : vector<1x128xf32> to vector<64x128xf32>
    %5 = arith.addf %2, %4 : vector<64x128xf32>
    %c0_5 = arith.constant 0 : index
    %c0_6 = arith.constant 0 : index
    %6 = vector.load %arg3[%c0_5, %c0_6] : memref<32x128xf32, #tpu.memory_space<vmem>>, vector<32x128xf32>
    %cst_7 = arith.constant 0.000000e+00 : f32
    %7 = vector.broadcast %cst_7 : f32 to vector<8x32xf32>
    %cst_8 = arith.constant 0.000000e+00 : f32
    %8 = vector.broadcast %cst_8 : f32 to vector<8x32xf32>
    %9 = vector.extract_strided_slice %5 {offsets = [0, 0], sizes = [8, 128], strides = [1, 1]} : vector<64x128xf32> to vector<8x128xf32>
    %cst_9 = arith.constant dense<0.000000e+00> : vector<8x128xf32>
    %10 = tpu.matmul %7, %6, %cst_9 {dimension_numbers = #tpu.dot_dimension_numbers<[1], [0], [0], [1], [0, 0, 1, 1], [], []>} : vector<8x32xf32>, vector<32x128xf32>, vector<8x128xf32> -> vector<8x128xf32>
    %11 = arith.addf %9, %10 : vector<8x128xf32>
    %cst_10 = arith.constant 5.000000e-01 : f32
    %12 = vector.broadcast %cst_10 : f32 to vector<8x128xf32>
    %13 = arith.mulf %12, %11 : vector<8x128xf32>
    %14 = math.tanh %13 : vector<8x128xf32>
    %cst_11 = arith.constant 1.000000e+00 : f32
    %15 = vector.broadcast %cst_11 : f32 to vector<8x128xf32>
    %16 = arith.addf %14, %15 : vector<8x128xf32>
    %cst_12 = arith.constant 5.000000e-01 : f32
    %17 = vector.broadcast %cst_12 : f32 to vector<8x128xf32>
    %18 = arith.mulf %17, %16 : vector<8x128xf32>
    %19 = vector.extract_strided_slice %18 {offsets = [0, 0], sizes = [8, 32], strides = [1, 1]} : vector<8x128xf32> to vector<8x32xf32>
    %20 = vector.extract_strided_slice %18 {offsets = [0, 32], sizes = [8, 32], strides = [1, 1]} : vector<8x128xf32> to vector<8x32xf32>
    %21 = vector.extract_strided_slice %18 {offsets = [0, 96], sizes = [8, 32], strides = [1, 1]} : vector<8x128xf32> to vector<8x32xf32>
    %22 = vector.extract_strided_slice %11 {offsets = [0, 64], sizes = [8, 32], strides = [1, 1]} : vector<8x128xf32> to vector<8x32xf32>
    %23 = math.tanh %22 : vector<8x32xf32>
    %24 = arith.mulf %20, %8 : vector<8x32xf32>
    %25 = arith.mulf %19, %23 : vector<8x32xf32>
    %26 = arith.addf %24, %25 : vector<8x32xf32>
    %27 = math.tanh %26 : vector<8x32xf32>
    %28 = arith.mulf %21, %27 : vector<8x32xf32>
    %29 = vector.extract_strided_slice %5 {offsets = [8, 0], sizes = [8, 128], strides = [1, 1]} : vector<64x128xf32> to vector<8x128xf32>
    %cst_13 = arith.constant dense<0.000000e+00> : vector<8x128xf32>
    %30 = tpu.matmul %28, %6, %cst_13 {dimension_numbers = #tpu.dot_dimension_numbers<[1], [0], [0], [1], [0, 0, 1, 1], [], []>} : vector<8x32xf32>, vector<32x128xf32>, vector<8x128xf32> -> vector<8x128xf32>
    %31 = arith.addf %29, %30 : vector<8x128xf32>
    %cst_14 = arith.constant 5.000000e-01 : f32
    %32 = vector.broadcast %cst_14 : f32 to vector<8x128xf32>
    %33 = arith.mulf %32, %31 : vector<8x128xf32>
    %34 = math.tanh %33 : vector<8x128xf32>
    %cst_15 = arith.constant 1.000000e+00 : f32
    %35 = vector.broadcast %cst_15 : f32 to vector<8x128xf32>
    %36 = arith.addf %34, %35 : vector<8x128xf32>
    %cst_16 = arith.constant 5.000000e-01 : f32
    %37 = vector.broadcast %cst_16 : f32 to vector<8x128xf32>
    %38 = arith.mulf %37, %36 : vector<8x128xf32>
    %39 = vector.extract_strided_slice %38 {offsets = [0, 0], sizes = [8, 32], strides = [1, 1]} : vector<8x128xf32> to vector<8x32xf32>
    %40 = vector.extract_strided_slice %38 {offsets = [0, 32], sizes = [8, 32], strides = [1, 1]} : vector<8x128xf32> to vector<8x32xf32>
    %41 = vector.extract_strided_slice %38 {offsets = [0, 96], sizes = [8, 32], strides = [1, 1]} : vector<8x128xf32> to vector<8x32xf32>
    %42 = vector.extract_strided_slice %31 {offsets = [0, 64], sizes = [8, 32], strides = [1, 1]} : vector<8x128xf32> to vector<8x32xf32>
    %43 = math.tanh %42 : vector<8x32xf32>
    %44 = arith.mulf %40, %26 : vector<8x32xf32>
    %45 = arith.mulf %39, %43 : vector<8x32xf32>
    %46 = arith.addf %44, %45 : vector<8x32xf32>
    %47 = math.tanh %46 : vector<8x32xf32>
    %48 = arith.mulf %41, %47 : vector<8x32xf32>
    %49 = vector.extract_strided_slice %5 {offsets = [16, 0], sizes = [8, 128], strides = [1, 1]} : vector<64x128xf32> to vector<8x128xf32>
    %cst_17 = arith.constant dense<0.000000e+00> : vector<8x128xf32>
    %50 = tpu.matmul %48, %6, %cst_17 {dimension_numbers = #tpu.dot_dimension_numbers<[1], [0], [0], [1], [0, 0, 1, 1], [], []>} : vector<8x32xf32>, vector<32x128xf32>, vector<8x128xf32> -> vector<8x128xf32>
    %51 = arith.addf %49, %50 : vector<8x128xf32>
    %cst_18 = arith.constant 5.000000e-01 : f32
    %52 = vector.broadcast %cst_18 : f32 to vector<8x128xf32>
    %53 = arith.mulf %52, %51 : vector<8x128xf32>
    %54 = math.tanh %53 : vector<8x128xf32>
    %cst_19 = arith.constant 1.000000e+00 : f32
    %55 = vector.broadcast %cst_19 : f32 to vector<8x128xf32>
    %56 = arith.addf %54, %55 : vector<8x128xf32>
    %cst_20 = arith.constant 5.000000e-01 : f32
    %57 = vector.broadcast %cst_20 : f32 to vector<8x128xf32>
    %58 = arith.mulf %57, %56 : vector<8x128xf32>
    %59 = vector.extract_strided_slice %58 {offsets = [0, 0], sizes = [8, 32], strides = [1, 1]} : vector<8x128xf32> to vector<8x32xf32>
    %60 = vector.extract_strided_slice %58 {offsets = [0, 32], sizes = [8, 32], strides = [1, 1]} : vector<8x128xf32> to vector<8x32xf32>
    %61 = vector.extract_strided_slice %58 {offsets = [0, 96], sizes = [8, 32], strides = [1, 1]} : vector<8x128xf32> to vector<8x32xf32>
    %62 = vector.extract_strided_slice %51 {offsets = [0, 64], sizes = [8, 32], strides = [1, 1]} : vector<8x128xf32> to vector<8x32xf32>
    %63 = math.tanh %62 : vector<8x32xf32>
    %64 = arith.mulf %60, %46 : vector<8x32xf32>
    %65 = arith.mulf %59, %63 : vector<8x32xf32>
    %66 = arith.addf %64, %65 : vector<8x32xf32>
    %67 = math.tanh %66 : vector<8x32xf32>
    %68 = arith.mulf %61, %67 : vector<8x32xf32>
    %69 = vector.extract_strided_slice %5 {offsets = [24, 0], sizes = [8, 128], strides = [1, 1]} : vector<64x128xf32> to vector<8x128xf32>
    %cst_21 = arith.constant dense<0.000000e+00> : vector<8x128xf32>
    %70 = tpu.matmul %68, %6, %cst_21 {dimension_numbers = #tpu.dot_dimension_numbers<[1], [0], [0], [1], [0, 0, 1, 1], [], []>} : vector<8x32xf32>, vector<32x128xf32>, vector<8x128xf32> -> vector<8x128xf32>
    %71 = arith.addf %69, %70 : vector<8x128xf32>
    %cst_22 = arith.constant 5.000000e-01 : f32
    %72 = vector.broadcast %cst_22 : f32 to vector<8x128xf32>
    %73 = arith.mulf %72, %71 : vector<8x128xf32>
    %74 = math.tanh %73 : vector<8x128xf32>
    %cst_23 = arith.constant 1.000000e+00 : f32
    %75 = vector.broadcast %cst_23 : f32 to vector<8x128xf32>
    %76 = arith.addf %74, %75 : vector<8x128xf32>
    %cst_24 = arith.constant 5.000000e-01 : f32
    %77 = vector.broadcast %cst_24 : f32 to vector<8x128xf32>
    %78 = arith.mulf %77, %76 : vector<8x128xf32>
    %79 = vector.extract_strided_slice %78 {offsets = [0, 0], sizes = [8, 32], strides = [1, 1]} : vector<8x128xf32> to vector<8x32xf32>
    %80 = vector.extract_strided_slice %78 {offsets = [0, 32], sizes = [8, 32], strides = [1, 1]} : vector<8x128xf32> to vector<8x32xf32>
    %81 = vector.extract_strided_slice %78 {offsets = [0, 96], sizes = [8, 32], strides = [1, 1]} : vector<8x128xf32> to vector<8x32xf32>
    %82 = vector.extract_strided_slice %71 {offsets = [0, 64], sizes = [8, 32], strides = [1, 1]} : vector<8x128xf32> to vector<8x32xf32>
    %83 = math.tanh %82 : vector<8x32xf32>
    %84 = arith.mulf %80, %66 : vector<8x32xf32>
    %85 = arith.mulf %79, %83 : vector<8x32xf32>
    %86 = arith.addf %84, %85 : vector<8x32xf32>
    %87 = math.tanh %86 : vector<8x32xf32>
    %88 = arith.mulf %81, %87 : vector<8x32xf32>
    %89 = vector.extract_strided_slice %5 {offsets = [32, 0], sizes = [8, 128], strides = [1, 1]} : vector<64x128xf32> to vector<8x128xf32>
    %cst_25 = arith.constant dense<0.000000e+00> : vector<8x128xf32>
    %90 = tpu.matmul %88, %6, %cst_25 {dimension_numbers = #tpu.dot_dimension_numbers<[1], [0], [0], [1], [0, 0, 1, 1], [], []>} : vector<8x32xf32>, vector<32x128xf32>, vector<8x128xf32> -> vector<8x128xf32>
    %91 = arith.addf %89, %90 : vector<8x128xf32>
    %cst_26 = arith.constant 5.000000e-01 : f32
    %92 = vector.broadcast %cst_26 : f32 to vector<8x128xf32>
    %93 = arith.mulf %92, %91 : vector<8x128xf32>
    %94 = math.tanh %93 : vector<8x128xf32>
    %cst_27 = arith.constant 1.000000e+00 : f32
    %95 = vector.broadcast %cst_27 : f32 to vector<8x128xf32>
    %96 = arith.addf %94, %95 : vector<8x128xf32>
    %cst_28 = arith.constant 5.000000e-01 : f32
    %97 = vector.broadcast %cst_28 : f32 to vector<8x128xf32>
    %98 = arith.mulf %97, %96 : vector<8x128xf32>
    %99 = vector.extract_strided_slice %98 {offsets = [0, 0], sizes = [8, 32], strides = [1, 1]} : vector<8x128xf32> to vector<8x32xf32>
    %100 = vector.extract_strided_slice %98 {offsets = [0, 32], sizes = [8, 32], strides = [1, 1]} : vector<8x128xf32> to vector<8x32xf32>
    %101 = vector.extract_strided_slice %98 {offsets = [0, 96], sizes = [8, 32], strides = [1, 1]} : vector<8x128xf32> to vector<8x32xf32>
    %102 = vector.extract_strided_slice %91 {offsets = [0, 64], sizes = [8, 32], strides = [1, 1]} : vector<8x128xf32> to vector<8x32xf32>
    %103 = math.tanh %102 : vector<8x32xf32>
    %104 = arith.mulf %100, %86 : vector<8x32xf32>
    %105 = arith.mulf %99, %103 : vector<8x32xf32>
    %106 = arith.addf %104, %105 : vector<8x32xf32>
    %107 = math.tanh %106 : vector<8x32xf32>
    %108 = arith.mulf %101, %107 : vector<8x32xf32>
    %109 = vector.extract_strided_slice %5 {offsets = [40, 0], sizes = [8, 128], strides = [1, 1]} : vector<64x128xf32> to vector<8x128xf32>
    %cst_29 = arith.constant dense<0.000000e+00> : vector<8x128xf32>
    %110 = tpu.matmul %108, %6, %cst_29 {dimension_numbers = #tpu.dot_dimension_numbers<[1], [0], [0], [1], [0, 0, 1, 1], [], []>} : vector<8x32xf32>, vector<32x128xf32>, vector<8x128xf32> -> vector<8x128xf32>
    %111 = arith.addf %109, %110 : vector<8x128xf32>
    %cst_30 = arith.constant 5.000000e-01 : f32
    %112 = vector.broadcast %cst_30 : f32 to vector<8x128xf32>
    %113 = arith.mulf %112, %111 : vector<8x128xf32>
    %114 = math.tanh %113 : vector<8x128xf32>
    %cst_31 = arith.constant 1.000000e+00 : f32
    %115 = vector.broadcast %cst_31 : f32 to vector<8x128xf32>
    %116 = arith.addf %114, %115 : vector<8x128xf32>
    %cst_32 = arith.constant 5.000000e-01 : f32
    %117 = vector.broadcast %cst_32 : f32 to vector<8x128xf32>
    %118 = arith.mulf %117, %116 : vector<8x128xf32>
    %119 = vector.extract_strided_slice %118 {offsets = [0, 0], sizes = [8, 32], strides = [1, 1]} : vector<8x128xf32> to vector<8x32xf32>
    %120 = vector.extract_strided_slice %118 {offsets = [0, 32], sizes = [8, 32], strides = [1, 1]} : vector<8x128xf32> to vector<8x32xf32>
    %121 = vector.extract_strided_slice %118 {offsets = [0, 96], sizes = [8, 32], strides = [1, 1]} : vector<8x128xf32> to vector<8x32xf32>
    %122 = vector.extract_strided_slice %111 {offsets = [0, 64], sizes = [8, 32], strides = [1, 1]} : vector<8x128xf32> to vector<8x32xf32>
    %123 = math.tanh %122 : vector<8x32xf32>
    %124 = arith.mulf %120, %106 : vector<8x32xf32>
    %125 = arith.mulf %119, %123 : vector<8x32xf32>
    %126 = arith.addf %124, %125 : vector<8x32xf32>
    %127 = math.tanh %126 : vector<8x32xf32>
    %128 = arith.mulf %121, %127 : vector<8x32xf32>
    %129 = vector.extract_strided_slice %5 {offsets = [48, 0], sizes = [8, 128], strides = [1, 1]} : vector<64x128xf32> to vector<8x128xf32>
    %cst_33 = arith.constant dense<0.000000e+00> : vector<8x128xf32>
    %130 = tpu.matmul %128, %6, %cst_33 {dimension_numbers = #tpu.dot_dimension_numbers<[1], [0], [0], [1], [0, 0, 1, 1], [], []>} : vector<8x32xf32>, vector<32x128xf32>, vector<8x128xf32> -> vector<8x128xf32>
    %131 = arith.addf %129, %130 : vector<8x128xf32>
    %cst_34 = arith.constant 5.000000e-01 : f32
    %132 = vector.broadcast %cst_34 : f32 to vector<8x128xf32>
    %133 = arith.mulf %132, %131 : vector<8x128xf32>
    %134 = math.tanh %133 : vector<8x128xf32>
    %cst_35 = arith.constant 1.000000e+00 : f32
    %135 = vector.broadcast %cst_35 : f32 to vector<8x128xf32>
    %136 = arith.addf %134, %135 : vector<8x128xf32>
    %cst_36 = arith.constant 5.000000e-01 : f32
    %137 = vector.broadcast %cst_36 : f32 to vector<8x128xf32>
    %138 = arith.mulf %137, %136 : vector<8x128xf32>
    %139 = vector.extract_strided_slice %138 {offsets = [0, 0], sizes = [8, 32], strides = [1, 1]} : vector<8x128xf32> to vector<8x32xf32>
    %140 = vector.extract_strided_slice %138 {offsets = [0, 32], sizes = [8, 32], strides = [1, 1]} : vector<8x128xf32> to vector<8x32xf32>
    %141 = vector.extract_strided_slice %138 {offsets = [0, 96], sizes = [8, 32], strides = [1, 1]} : vector<8x128xf32> to vector<8x32xf32>
    %142 = vector.extract_strided_slice %131 {offsets = [0, 64], sizes = [8, 32], strides = [1, 1]} : vector<8x128xf32> to vector<8x32xf32>
    %143 = math.tanh %142 : vector<8x32xf32>
    %144 = arith.mulf %140, %126 : vector<8x32xf32>
    %145 = arith.mulf %139, %143 : vector<8x32xf32>
    %146 = arith.addf %144, %145 : vector<8x32xf32>
    %147 = math.tanh %146 : vector<8x32xf32>
    %148 = arith.mulf %141, %147 : vector<8x32xf32>
    %149 = vector.extract_strided_slice %5 {offsets = [56, 0], sizes = [8, 128], strides = [1, 1]} : vector<64x128xf32> to vector<8x128xf32>
    %cst_37 = arith.constant dense<0.000000e+00> : vector<8x128xf32>
    %150 = tpu.matmul %148, %6, %cst_37 {dimension_numbers = #tpu.dot_dimension_numbers<[1], [0], [0], [1], [0, 0, 1, 1], [], []>} : vector<8x32xf32>, vector<32x128xf32>, vector<8x128xf32> -> vector<8x128xf32>
    %151 = arith.addf %149, %150 : vector<8x128xf32>
    %cst_38 = arith.constant 5.000000e-01 : f32
    %152 = vector.broadcast %cst_38 : f32 to vector<8x128xf32>
    %153 = arith.mulf %152, %151 : vector<8x128xf32>
    %154 = math.tanh %153 : vector<8x128xf32>
    %cst_39 = arith.constant 1.000000e+00 : f32
    %155 = vector.broadcast %cst_39 : f32 to vector<8x128xf32>
    %156 = arith.addf %154, %155 : vector<8x128xf32>
    %cst_40 = arith.constant 5.000000e-01 : f32
    %157 = vector.broadcast %cst_40 : f32 to vector<8x128xf32>
    %158 = arith.mulf %157, %156 : vector<8x128xf32>
    %159 = vector.extract_strided_slice %158 {offsets = [0, 0], sizes = [8, 32], strides = [1, 1]} : vector<8x128xf32> to vector<8x32xf32>
    %160 = vector.extract_strided_slice %158 {offsets = [0, 32], sizes = [8, 32], strides = [1, 1]} : vector<8x128xf32> to vector<8x32xf32>
    %161 = vector.extract_strided_slice %158 {offsets = [0, 96], sizes = [8, 32], strides = [1, 1]} : vector<8x128xf32> to vector<8x32xf32>
    %162 = vector.extract_strided_slice %151 {offsets = [0, 64], sizes = [8, 32], strides = [1, 1]} : vector<8x128xf32> to vector<8x32xf32>
    %163 = math.tanh %162 : vector<8x32xf32>
    %164 = arith.mulf %160, %146 : vector<8x32xf32>
    %165 = arith.mulf %159, %163 : vector<8x32xf32>
    %166 = arith.addf %164, %165 : vector<8x32xf32>
    %167 = math.tanh %166 : vector<8x32xf32>
    %168 = arith.mulf %161, %167 : vector<8x32xf32>
    %169 = tpu.concatenate %28, %48, %68, %88, %108, %128, %148, %168 in 1 : vector<8x32xf32>, vector<8x32xf32>, vector<8x32xf32>, vector<8x32xf32>, vector<8x32xf32>, vector<8x32xf32>, vector<8x32xf32>, vector<8x32xf32> -> vector<8x256xf32>
    %c0_41 = arith.constant 0 : index
    %c0_42 = arith.constant 0 : index
    %170 = vector.load %arg5[%c0_41, %c0_42] : memref<8x256xf32, #tpu.memory_space<vmem>>, vector<8x256xf32>
    tpu.vector_store %arg5[%c0_41, %c0_42], %169 {strides = array<i32>} : memref<8x256xf32, #tpu.memory_space<vmem>>, vector<8x256xf32>,
    %c0_43 = arith.constant 0 : index
    %c0_44 = arith.constant 0 : index
    %171 = vector.load %arg6[%c0_43, %c0_44] : memref<8x32xf32, #tpu.memory_space<vmem>>, vector<8x32xf32>
    tpu.vector_store %arg6[%c0_43, %c0_44], %166 {strides = array<i32>} : memref<8x32xf32, #tpu.memory_space<vmem>>, vector<8x32xf32>,
    return
  }
  func.func @transform_0(%arg0: i32) -> (i32, i32) {
    %c0_i32 = arith.constant 0 : i32
    %c0_i32_0 = arith.constant 0 : i32
    %c0_i32_1 = arith.constant 0 : i32
    return %c0_i32, %c0_i32_0 : i32, i32
  }
  func.func @transform_1(%arg0: i32) -> (i32, i32) {
    %c0_i32 = arith.constant 0 : i32
    %c0_i32_0 = arith.constant 0 : i32
    %c0_i32_1 = arith.constant 0 : i32
    return %c0_i32, %c0_i32_0 : i32, i32
  }
  func.func @transform_2(%arg0: i32) -> (i32, i32) {
    %c0_i32 = arith.constant 0 : i32
    %c0_i32_0 = arith.constant 0 : i32
    %c0_i32_1 = arith.constant 0 : i32
    return %c0_i32, %c0_i32_0 : i32, i32
  }
  func.func @transform_3(%arg0: i32) -> (i32, i32) {
    %c0_i32 = arith.constant 0 : i32
    %c0_i32_0 = arith.constant 0 : i32
    %c0_i32_1 = arith.constant 0 : i32
    return %c0_i32, %c0_i32_0 : i32, i32
  }
  func.func @transform_4(%arg0: i32) -> (i32, i32) {
    %c0_i32 = arith.constant 0 : i32
    %c0_i32_0 = arith.constant 0 : i32
    %c0_i32_1 = arith.constant 0 : i32
    return %c0_i32, %c0_i32_0 : i32, i32
  }
  func.func @transform_5(%arg0: i32) -> (i32, i32) {
    %c0_i32 = arith.constant 0 : i32
    %c0_i32_0 = arith.constant 0 : i32
    %c0_i32_1 = arith.constant 0 : i32
    return %c0_i32, %c0_i32_0 : i32, i32
  }
}

</mosaic_0001>

<llo_original>
// kernel: tpu_custom_call.1
$region0: #{tpu_custom_call.1}
  #allocation0 [shape = 'u32[]', space=smem, size = 0x4, offset = 0x4, fixed_abs, tag = 'smem constant byte address 0x4 - core index']
  #allocation1 [shape = 'u32[144,128]{1,0:T(1,128)}', space=vmem, size = 0x12000, scoped, tag = 'internal scratch']
  %s0 = inlined_call_operand.vmem [shape: f32[64,16], index: 0, kind: input, shape index: {}]
  %s1 = inlined_call_operand.vmem [shape: f32[16,128], index: 1, kind: input, shape index: {}]
  %s2 = inlined_call_operand.vmem [shape: f32[32,128], index: 2, kind: input, shape index: {}]
  %s3 = inlined_call_operand.vmem [shape: f32[1,128], index: 3, kind: input, shape index: {}]
  %s4 = inlined_call_operand.hbm [shape: f32[8,256], index: 4, kind: output, shape index: {0}]
  %s5 = inlined_call_operand.hbm [shape: f32[8,32], index: 5, kind: output, shape index: {1}]
  %6 = xla_tuple %s4, %s5
  %s7 = sld [smem:[#allocation0]]
  $region34: #{tpu_custom_call.1} parent=0
    _
  %s9 = ssub.s32 1, %s7
  %s10 = scalar_select 0, %s9, %s7
  $region1: #{tpu_custom_call.1} parent=0
    #allocation2 [shape = 'u8[8192]{0}', space=vmem, size = 0x2000, scoped, tag = 'output window, operand 0, single buffered']
    #allocation3 [shape = 's32[1]{0}', space=sflag, size = 0x4, scoped, tag = 'scoped memory for tpu_custom_call.1']
    #allocation4 [shape = 'u8[4096]{0}', space=vmem, size = 0x1000, scoped, tag = 'output window, operand 1, single buffered']
    #allocation5 [shape = 's32[1]{0}', space=sflag, size = 0x4, scoped, tag = 'scoped memory for tpu_custom_call.1']
    %11 = vsyncpa [#allocation3], 0
    %12 = vsyncpa [#allocation5], 0
    // Predicated region
    $region2: #{tpu_custom_call.1} parent=1 // pred_check
      _
    $region3: #{tpu_custom_call.1} parent=1 // pred_check_branch
      %14 = sbr.rel (0) target = $region5
    $region4: #{tpu_custom_call.1} parent=1 // pred_region
      _
    $region5: #{tpu_custom_call.1} parent=1 // pred_fallthru
      _
    // Predicated region
    $region6: #{tpu_custom_call.1} parent=1 // pred_check
      _
    $region7: #{tpu_custom_call.1} parent=1 // pred_check_branch
      %16 = sbr.rel (0) target = $region9
    $region8: #{tpu_custom_call.1} parent=1 // pred_region
      _
    $region9: #{tpu_custom_call.1} parent=1 // pred_fallthru
      _
    // Predicated region
    $region10: #{tpu_custom_call.1} parent=1 // pred_check
      _
    $region11: #{tpu_custom_call.1} parent=1 // pred_check_branch
      %18 = sbr.rel (0) target = $region13
    $region12: #{tpu_custom_call.1} parent=1 // pred_region
      _
    $region13: #{tpu_custom_call.1} parent=1 // pred_fallthru
      _
    // Predicated region
    $region14: #{tpu_custom_call.1} parent=1 // pred_check
      _
    $region15: #{tpu_custom_call.1} parent=1 // pred_check_branch
      %20 = sbr.rel (0) target = $region17
    $region16: #{tpu_custom_call.1} parent=1 // pred_region
      _
    $region17: #{tpu_custom_call.1} parent=1 // pred_fallthru
      _
    %v21 = vld [vmem:[%s0] sm:$0xff]
    %v22 = vld [vmem:[%s0 + $0x8] sm:$0xff]
    %v23 = vld [vmem:[%s0 + $0x10] sm:$0xff]
    %v24 = vld [vmem:[%s0 + $0x18] sm:$0xff]
    %v25 = vld [vmem:[%s0 + $0x20] sm:$0xff]
    %v26 = vld [vmem:[%s0 + $0x28] sm:$0xff]
    %v27 = vld [vmem:[%s0 + $0x30] sm:$0xff]
    %v28 = vld [vmem:[%s0 + $0x38] sm:$0xff]
    %v29 = vld [vmem:[%s1] sm:$0xff]
    %v30 = vld [vmem:[%s1 + $0x8] sm:$0xff]
    %v31 = vld [vmem:[%s3] sm:$0x1]
    %v33 = vlaneseq
    %v34 = vshrl.u32 %v33, 7
    %v35 = vsub.s32 0, %v34
    %v36 = vrot.slane %v31, %v35
    %vm38 = vcmask 130048
    %v40 = vsel %vm38, %v21, 0
    %v43 = vsel %vm38, %v22, 0
    %v46 = vsel %vm38, %v23, 0
    %v49 = vsel %vm38, %v24, 0
    %v52 = vsel %vm38, %v25, 0
    %v55 = vsel %vm38, %v26, 0
    %v58 = vsel %vm38, %v27, 0
    %v61 = vsel %vm38, %v28, 0
    %63 = vmatprep.subr.mxu0 0.0
    %64 = vmatpush1.msra.mxu0 %v29
    %65 = vmatprep.subr.mxu0 0.0
    %66 = vmatpush1.msra.mxu0 %v30
    %67 = vmatprep.subr.mxu0 0.0
    %68 = vmatpush1.msra.mxu0 0.0
    %69 = vmatprep.subr.mxu0 0.0
    %70 = vmatpush1.msra.mxu0 0.0
    %71 = vmatprep.subr.mxu0 0.0
    %72 = vmatpush1.msra.mxu0 0.0
    %73 = vmatprep.subr.mxu0 0.0
    %74 = vmatpush1.msra.mxu0 0.0
    %75 = vmatprep.subr.mxu0 0.0
    %76 = vmatpush1.msra.mxu0 0.0
    %77 = vmatprep.subr.mxu0 0.0
    %78 = vmatpush1.msra.mxu0 0.0
    %79 = vmatprep.subr.mxu0 0.0
    %80 = vmatpush1.msra.mxu0 0.0
    %81 = vmatprep.subr.mxu0 0.0
    %82 = vmatpush1.msra.mxu0 0.0
    %83 = vmatprep.subr.mxu0 0.0
    %84 = vmatpush1.msra.mxu0 0.0
    %85 = vmatprep.subr.mxu0 0.0
    %86 = vmatpush1.msra.mxu0 0.0
    %87 = vmatprep.subr.mxu0 0.0
    %88 = vmatpush1.msra.mxu0 0.0
    %89 = vmatprep.subr.mxu0 0.0
    %90 = vmatpush1.msra.mxu0 0.0
    %91 = vmatprep.subr.mxu0 0.0
    %92 = vmatpush1.msra.mxu0 0.0
    %93 = vmatprep.subr.mxu0 0.0
    %94 = vmatpush1.msra.mxu0 0.0
    %95 = vmatprep.subr.mxu0 0.0
    %96 = vmatpush1.msra.mxu0 0.0
    %97 = vmatprep.subr.mxu0 0.0
    %98 = vmatpush1.msra.mxu0 0.0
    %99 = vmatprep.subr.mxu0 0.0
    %100 = vmatpush1.msra.mxu0 0.0
    %101 = vmatprep.subr.mxu0 0.0
    %102 = vmatpush1.msra.mxu0 0.0
    %103 = vmatprep.subr.mxu0 0.0
    %104 = vmatpush1.msra.mxu0 0.0
    %105 = vmatprep.subr.mxu0 0.0
    %106 = vmatpush1.msra.mxu0 0.0
    %107 = vmatprep.subr.mxu0 0.0
    %108 = vmatpush1.msra.mxu0 0.0
    %109 = vmatprep.subr.mxu0 0.0
    %110 = vmatpush1.msra.mxu0 0.0
    %111 = vmatprep.subr.mxu0 0.0
    %112 = vmatpush1.msra.mxu0 0.0
    %113 = vmatprep.subr.mxu0 0.0
    %114 = vmatpush1.msra.mxu0 0.0
    %115 = vmatprep.subr.mxu0 0.0
    %116 = vmatpush1.msra.mxu0 0.0
    %117 = vmatprep.subr.mxu0 0.0
    %118 = vmatpush1.msra.mxu0 0.0
    %119 = vmatprep.subr.mxu0 0.0
    %120 = vmatpush1.msra.mxu0 0.0
    %121 = vmatprep.subr.mxu0 0.0
    %122 = vmatpush1.msra.mxu0 0.0
    %123 = vmatprep.subr.mxu0 0.0
    %124 = vmatpush1.msra.mxu0 0.0
    %125 = vmatprep.subr.mxu0 0.0
    %126 = vmatpush1.msra.mxu0 0.0
    %127 = vmatprep.mubr.f32.mxu0 0.0
    %128 = vmatmul.mubr.f32.gmra.mrb[0].mxu0 %v40
    %v129 = vpop.f32.mrb[0].mxu0
    %v130 = vadd.f32 %v36, %v129
    %v131 = vpop.f32.mrb[0].mxu0
    %132 = vmatprep.mubr.f32.mxu0 0.0
    %133 = vmatmul.mubr.f32.gmra.mrb[0].mxu0 %v43
    %v134 = vpop.f32.mrb[0].mxu0
    %v135 = vadd.f32 %v36, %v134
    %v136 = vpop.f32.mrb[0].mxu0
    %137 = vmatprep.mubr.f32.mxu0 0.0
    %138 = vmatmul.mubr.f32.gmra.mrb[0].mxu0 %v46
    %v139 = vpop.f32.mrb[0].mxu0
    %v140 = vadd.f32 %v36, %v139
    %v141 = vpop.f32.mrb[0].mxu0
    %142 = vmatprep.mubr.f32.mxu0 0.0
    %143 = vmatmul.mubr.f32.gmra.mrb[0].mxu0 %v49
    %v144 = vpop.f32.mrb[0].mxu0
    %v145 = vadd.f32 %v36, %v144
    %v146 = vpop.f32.mrb[0].mxu0
    %147 = vmatprep.mubr.f32.mxu0 0.0
    %148 = vmatmul.mubr.f32.gmra.mrb[0].mxu0 %v52
    %v149 = vpop.f32.mrb[0].mxu0
    %v150 = vadd.f32 %v36, %v149
    %v151 = vpop.f32.mrb[0].mxu0
    %152 = vmatprep.mubr.f32.mxu0 0.0
    %153 = vmatmul.mubr.f32.gmra.mrb[0].mxu0 %v55
    %v154 = vpop.f32.mrb[0].mxu0
    %v155 = vadd.f32 %v36, %v154
    %v156 = vpop.f32.mrb[0].mxu0
    %157 = vmatprep.mubr.f32.mxu0 0.0
    %158 = vmatmul.mubr.f32.gmra.mrb[0].mxu0 %v58
    %v159 = vpop.f32.mrb[0].mxu0
    %v160 = vadd.f32 %v36, %v159
    %v161 = vpop.f32.mrb[0].mxu0
    %162 = vmatprep.mubr.f32.mxu0 0.0
    %163 = vmatmul.mubr.f32.gmra.mrb[0].mxu0 %v61
    %v164 = vpop.f32.mrb[0].mxu0
    %v165 = vadd.f32 %v36, %v164
    %v166 = vpop.f32.mrb[0].mxu0
    %167 = vdwg.mxu0
    %v168 = vld [vmem:[%s2] sm:$0xff]
    %v169 = vld [vmem:[%s2 + $0x8] sm:$0xff]
    %v170 = vld [vmem:[%s2 + $0x10] sm:$0xff]
    %v171 = vld [vmem:[%s2 + $0x18] sm:$0xff]
    %vm172 = vcmask 261120
    %v174 = vsel %vm172, 0.0, 0
    %176 = vmatprep.subr.mxu0 0.0
    %177 = vmatpush1.msra.mxu0 %v168
    %178 = vmatprep.subr.mxu0 0.0
    %179 = vmatpush1.msra.mxu0 %v169
    %180 = vmatprep.subr.mxu0 0.0
    %181 = vmatpush1.msra.mxu0 %v170
    %182 = vmatprep.subr.mxu0 0.0
    %183 = vmatpush1.msra.mxu0 %v171
    %184 = vmatprep.subr.mxu0 0.0
    %185 = vmatpush1.msra.mxu0 0.0
    %186 = vmatprep.subr.mxu0 0.0
    %187 = vmatpush1.msra.mxu0 0.0
    %188 = vmatprep.subr.mxu0 0.0
    %189 = vmatpush1.msra.mxu0 0.0
    %190 = vmatprep.subr.mxu0 0.0
    %191 = vmatpush1.msra.mxu0 0.0
    %192 = vmatprep.subr.mxu0 0.0
    %193 = vmatpush1.msra.mxu0 0.0
    %194 = vmatprep.subr.mxu0 0.0
    %195 = vmatpush1.msra.mxu0 0.0
    %196 = vmatprep.subr.mxu0 0.0
    %197 = vmatpush1.msra.mxu0 0.0
    %198 = vmatprep.subr.mxu0 0.0
    %199 = vmatpush1.msra.mxu0 0.0
    %200 = vmatprep.subr.mxu0 0.0
    %201 = vmatpush1.msra.mxu0 0.0
    %202 = vmatprep.subr.mxu0 0.0
    %203 = vmatpush1.msra.mxu0 0.0
    %204 = vmatprep.subr.mxu0 0.0
    %205 = vmatpush1.msra.mxu0 0.0
    %206 = vmatprep.subr.mxu0 0.0
    %207 = vmatpush1.msra.mxu0 0.0
    %208 = vmatprep.subr.mxu0 0.0
    %209 = vmatpush1.msra.mxu0 0.0
    %210 = vmatprep.subr.mxu0 0.0
    %211 = vmatpush1.msra.mxu0 0.0
    %212 = vmatprep.subr.mxu0 0.0
    %213 = vmatpush1.msra.mxu0 0.0
    %214 = vmatprep.subr.mxu0 0.0
    %215 = vmatpush1.msra.mxu0 0.0
    %216 = vmatprep.subr.mxu0 0.0
    %217 = vmatpush1.msra.mxu0 0.0
    %218 = vmatprep.subr.mxu0 0.0
    %219 = vmatpush1.msra.mxu0 0.0
    %220 = vmatprep.subr.mxu0 0.0
    %221 = vmatpush1.msra.mxu0 0.0
    %222 = vmatprep.subr.mxu0 0.0
    %223 = vmatpush1.msra.mxu0 0.0
    %224 = vmatprep.subr.mxu0 0.0
    %225 = vmatpush1.msra.mxu0 0.0
    %226 = vmatprep.subr.mxu0 0.0
    %227 = vmatpush1.msra.mxu0 0.0
    %228 = vmatprep.subr.mxu0 0.0
    %229 = vmatpush1.msra.mxu0 0.0
    %230 = vmatprep.subr.mxu0 0.0
    %231 = vmatpush1.msra.mxu0 0.0
    %232 = vmatprep.subr.mxu0 0.0
    %233 = vmatpush1.msra.mxu0 0.0
    %234 = vmatprep.subr.mxu0 0.0
    %235 = vmatpush1.msra.mxu0 0.0
    %236 = vmatprep.subr.mxu0 0.0
    %237 = vmatpush1.msra.mxu0 0.0
    %238 = vmatprep.subr.mxu0 0.0
    %239 = vmatpush1.msra.mxu0 0.0
    %240 = vmatprep.mubr.f32.mxu0 0.0
    %241 = vmatmul.mubr.f32.gmra.mrb[0].mxu0 %v174
    %v242 = vpop.f32.mrb[0].mxu0
    %v243 = vadd.f32 0.0, %v242
    %v244 = vpop.f32.mrb[0].mxu0
    %245 = vdwg.mxu0
    %v246 = vadd.f32 %v130, %v243
    %v247 = vmul.f32 %v246, 0.5
    %v248 = vtanh.pop %v247
    %v249 = vadd.f32 %v248, 1.0
    %v250 = vmul.f32 %v249, 0.5
    %v251 = vtanh.pop %v246
    %v252 = vmul.f32 %v250, 0.0
    %254 = vrot.lane.b32.xlu0 %v251, 64
    %v255 = vpop.permute.xlu0 %254
    %v257 = vmul.f32 %v250, %v255
    %259 = vrot.lane.b32.xlu0 %v257, 32
    %v260 = vpop.permute.xlu0 %259
    %v262 = vadd.f32 %v252, %v260
    %v263 = vtanh.pop %v262
    %265 = vrot.lane.b32.xlu0 %v263, 64
    %v266 = vpop.permute.xlu0 %265
    %v268 = vmul.f32 %v250, %v266
    %270 = vrot.lane.b32.xlu0 %v268, 32
    %v271 = vpop.permute.xlu0 %270
    %v272 = vsel %vm172, %v271, 0
    %274 = vmatprep.subr.mxu0 0.0
    %275 = vmatpush1.msra.mxu0 %v168
    %276 = vmatprep.subr.mxu0 0.0
    %277 = vmatpush1.msra.mxu0 %v169
    %278 = vmatprep.subr.mxu0 0.0
    %279 = vmatpush1.msra.mxu0 %v170
    %280 = vmatprep.subr.mxu0 0.0
    %281 = vmatpush1.msra.mxu0 %v171
    %282 = vmatprep.subr.mxu0 0.0
    %283 = vmatpush1.msra.mxu0 0.0
    %284 = vmatprep.subr.mxu0 0.0
    %285 = vmatpush1.msra.mxu0 0.0
    %286 = vmatprep.subr.mxu0 0.0
    %287 = vmatpush1.msra.mxu0 0.0
    %288 = vmatprep.subr.mxu0 0.0
    %289 = vmatpush1.msra.mxu0 0.0
    %290 = vmatprep.subr.mxu0 0.0
    %291 = vmatpush1.msra.mxu0 0.0
    %292 = vmatprep.subr.mxu0 0.0
    %293 = vmatpush1.msra.mxu0 0.0
    %294 = vmatprep.subr.mxu0 0.0
    %295 = vmatpush1.msra.mxu0 0.0
    %296 = vmatprep.subr.mxu0 0.0
    %297 = vmatpush1.msra.mxu0 0.0
    %298 = vmatprep.subr.mxu0 0.0
    %299 = vmatpush1.msra.mxu0 0.0
    %300 = vmatprep.subr.mxu0 0.0
    %301 = vmatpush1.msra.mxu0 0.0
    %302 = vmatprep.subr.mxu0 0.0
    %303 = vmatpush1.msra.mxu0 0.0
    %304 = vmatprep.subr.mxu0 0.0
    %305 = vmatpush1.msra.mxu0 0.0
    %306 = vmatprep.subr.mxu0 0.0
    %307 = vmatpush1.msra.mxu0 0.0
    %308 = vmatprep.subr.mxu0 0.0
    %309 = vmatpush1.msra.mxu0 0.0
    %310 = vmatprep.subr.mxu0 0.0
    %311 = vmatpush1.msra.mxu0 0.0
    %312 = vmatprep.subr.mxu0 0.0
    %313 = vmatpush1.msra.mxu0 0.0
    %314 = vmatprep.subr.mxu0 0.0
    %315 = vmatpush1.msra.mxu0 0.0
    %316 = vmatprep.subr.mxu0 0.0
    %317 = vmatpush1.msra.mxu0 0.0
    %318 = vmatprep.subr.mxu0 0.0
    %319 = vmatpush1.msra.mxu0 0.0
    %320 = vmatprep.subr.mxu0 0.0
    %321 = vmatpush1.msra.mxu0 0.0
    %322 = vmatprep.subr.mxu0 0.0
    %323 = vmatpush1.msra.mxu0 0.0
    %324 = vmatprep.subr.mxu0 0.0
    %325 = vmatpush1.msra.mxu0 0.0
    %326 = vmatprep.subr.mxu0 0.0
    %327 = vmatpush1.msra.mxu0 0.0
    %328 = vmatprep.subr.mxu0 0.0
    %329 = vmatpush1.msra.mxu0 0.0
    %330 = vmatprep.subr.mxu0 0.0
    %331 = vmatpush1.msra.mxu0 0.0
    %332 = vmatprep.subr.mxu0 0.0
    %333 = vmatpush1.msra.mxu0 0.0
    %334 = vmatprep.subr.mxu0 0.0
    %335 = vmatpush1.msra.mxu0 0.0
    %336 = vmatprep.subr.mxu0 0.0
    %337 = vmatpush1.msra.mxu0 0.0
    %338 = vmatprep.mubr.f32.mxu0 0.0
    %339 = vmatmul.mubr.f32.gmra.mrb[0].mxu0 %v272
    %v340 = vpop.f32.mrb[0].mxu0
    %v341 = vadd.f32 0.0, %v340
    %v342 = vpop.f32.mrb[0].mxu0
    %343 = vdwg.mxu0
    %v344 = vadd.f32 %v135, %v341
    %v345 = vmul.f32 %v344, 0.5
    %v346 = vtanh.pop %v345
    %v347 = vadd.f32 %v346, 1.0
    %v348 = vmul.f32 %v347, 0.5
    %v349 = vtanh.pop %v344
    %v350 = vmul.f32 %v348, %v262
    %352 = vrot.lane.b32.xlu0 %v349, 64
    %v353 = vpop.permute.xlu0 %352
    %v355 = vmul.f32 %v348, %v353
    %357 = vrot.lane.b32.xlu0 %v355, 32
    %v358 = vpop.permute.xlu0 %357
    %v360 = vadd.f32 %v350, %v358
    %v361 = vtanh.pop %v360
    %363 = vrot.lane.b32.xlu0 %v361, 64
    %v364 = vpop.permute.xlu0 %363
    %v366 = vmul.f32 %v348, %v364
    %368 = vrot.lane.b32.xlu0 %v366, 32
    %v369 = vpop.permute.xlu0 %368
    %v370 = vsel %vm172, %v369, 0
    %372 = vmatprep.subr.mxu0 0.0
    %373 = vmatpush1.msra.mxu0 %v168
    %374 = vmatprep.subr.mxu0 0.0
    %375 = vmatpush1.msra.mxu0 %v169
    %376 = vmatprep.subr.mxu0 0.0
    %377 = vmatpush1.msra.mxu0 %v170
    %378 = vmatprep.subr.mxu0 0.0
    %379 = vmatpush1.msra.mxu0 %v171
    %380 = vmatprep.subr.mxu0 0.0
    %381 = vmatpush1.msra.mxu0 0.0
    %382 = vmatprep.subr.mxu0 0.0
    %383 = vmatpush1.msra.mxu0 0.0
    %384 = vmatprep.subr.mxu0 0.0
    %385 = vmatpush1.msra.mxu0 0.0
    %386 = vmatprep.subr.mxu0 0.0
    %387 = vmatpush1.msra.mxu0 0.0
    %388 = vmatprep.subr.mxu0 0.0
    %389 = vmatpush1.msra.mxu0 0.0
    %390 = vmatprep.subr.mxu0 0.0
    %391 = vmatpush1.msra.mxu0 0.0
    %392 = vmatprep.subr.mxu0 0.0
    %393 = vmatpush1.msra.mxu0 0.0
    %394 = vmatprep.subr.mxu0 0.0
    %395 = vmatpush1.msra.mxu0 0.0
    %396 = vmatprep.subr.mxu0 0.0
    %397 = vmatpush1.msra.mxu0 0.0
    %398 = vmatprep.subr.mxu0 0.0
    %399 = vmatpush1.msra.mxu0 0.0
    %400 = vmatprep.subr.mxu0 0.0
    %401 = vmatpush1.msra.mxu0 0.0
    %402 = vmatprep.subr.mxu0 0.0
    %403 = vmatpush1.msra.mxu0 0.0
    %404 = vmatprep.subr.mxu0 0.0
    %405 = vmatpush1.msra.mxu0 0.0
    %406 = vmatprep.subr.mxu0 0.0
    %407 = vmatpush1.msra.mxu0 0.0
    %408 = vmatprep.subr.mxu0 0.0
    %409 = vmatpush1.msra.mxu0 0.0
    %410 = vmatprep.subr.mxu0 0.0
    %411 = vmatpush1.msra.mxu0 0.0
    %412 = vmatprep.subr.mxu0 0.0
    %413 = vmatpush1.msra.mxu0 0.0
    %414 = vmatprep.subr.mxu0 0.0
    %415 = vmatpush1.msra.mxu0 0.0
    %416 = vmatprep.subr.mxu0 0.0
    %417 = vmatpush1.msra.mxu0 0.0
    %418 = vmatprep.subr.mxu0 0.0
    %419 = vmatpush1.msra.mxu0 0.0
    %420 = vmatprep.subr.mxu0 0.0
    %421 = vmatpush1.msra.mxu0 0.0
    %422 = vmatprep.subr.mxu0 0.0
    %423 = vmatpush1.msra.mxu0 0.0
    %424 = vmatprep.subr.mxu0 0.0
    %425 = vmatpush1.msra.mxu0 0.0
    %426 = vmatprep.subr.mxu0 0.0
    %427 = vmatpush1.msra.mxu0 0.0
    %428 = vmatprep.subr.mxu0 0.0
    %429 = vmatpush1.msra.mxu0 0.0
    %430 = vmatprep.subr.mxu0 0.0
    %431 = vmatpush1.msra.mxu0 0.0
    %432 = vmatprep.subr.mxu0 0.0
    %433 = vmatpush1.msra.mxu0 0.0
    %434 = vmatprep.subr.mxu0 0.0
    %435 = vmatpush1.msra.mxu0 0.0
    %436 = vmatprep.mubr.f32.mxu0 0.0
    %437 = vmatmul.mubr.f32.gmra.mrb[0].mxu0 %v370
    %v438 = vpop.f32.mrb[0].mxu0
    %v439 = vadd.f32 0.0, %v438
    %v440 = vpop.f32.mrb[0].mxu0
    %441 = vdwg.mxu0
    %v442 = vadd.f32 %v140, %v439
    %v443 = vmul.f32 %v442, 0.5
    %v444 = vtanh.pop %v443
    %v445 = vadd.f32 %v444, 1.0
    %v446 = vmul.f32 %v445, 0.5
    %v447 = vtanh.pop %v442
    %v448 = vmul.f32 %v446, %v360
    %450 = vrot.lane.b32.xlu0 %v447, 64
    %v451 = vpop.permute.xlu0 %450
    %v453 = vmul.f32 %v446, %v451
    %455 = vrot.lane.b32.xlu0 %v453, 32
    %v456 = vpop.permute.xlu0 %455
    %v458 = vadd.f32 %v448, %v456
    %v459 = vtanh.pop %v458
    %461 = vrot.lane.b32.xlu0 %v459, 64
    %v462 = vpop.permute.xlu0 %461
    %v464 = vmul.f32 %v446, %v462
    %466 = vrot.lane.b32.xlu0 %v464, 32
    %v467 = vpop.permute.xlu0 %466
    %v468 = vsel %vm172, %v467, 0
    %470 = vmatprep.subr.mxu0 0.0
    %471 = vmatpush1.msra.mxu0 %v168
    %472 = vmatprep.subr.mxu0 0.0
    %473 = vmatpush1.msra.mxu0 %v169
    %474 = vmatprep.subr.mxu0 0.0
    %475 = vmatpush1.msra.mxu0 %v170
    %476 = vmatprep.subr.mxu0 0.0
    %477 = vmatpush1.msra.mxu0 %v171
    %478 = vmatprep.subr.mxu0 0.0
    %479 = vmatpush1.msra.mxu0 0.0
    %480 = vmatprep.subr.mxu0 0.0
    %481 = vmatpush1.msra.mxu0 0.0
    %482 = vmatprep.subr.mxu0 0.0
    %483 = vmatpush1.msra.mxu0 0.0
    %484 = vmatprep.subr.mxu0 0.0
    %485 = vmatpush1.msra.mxu0 0.0
    %486 = vmatprep.subr.mxu0 0.0
    %487 = vmatpush1.msra.mxu0 0.0
    %488 = vmatprep.subr.mxu0 0.0
    %489 = vmatpush1.msra.mxu0 0.0
    %490 = vmatprep.subr.mxu0 0.0
    %491 = vmatpush1.msra.mxu0 0.0
    %492 = vmatprep.subr.mxu0 0.0
    %493 = vmatpush1.msra.mxu0 0.0
    %494 = vmatprep.subr.mxu0 0.0
    %495 = vmatpush1.msra.mxu0 0.0
    %496 = vmatprep.subr.mxu0 0.0
    %497 = vmatpush1.msra.mxu0 0.0
    %498 = vmatprep.subr.mxu0 0.0
    %499 = vmatpush1.msra.mxu0 0.0
    %500 = vmatprep.subr.mxu0 0.0
    %501 = vmatpush1.msra.mxu0 0.0
    %502 = vmatprep.subr.mxu0 0.0
    %503 = vmatpush1.msra.mxu0 0.0
    %504 = vmatprep.subr.mxu0 0.0
    %505 = vmatpush1.msra.mxu0 0.0
    %506 = vmatprep.subr.mxu0 0.0
    %507 = vmatpush1.msra.mxu0 0.0
    %508 = vmatprep.subr.mxu0 0.0
    %509 = vmatpush1.msra.mxu0 0.0
    %510 = vmatprep.subr.mxu0 0.0
    %511 = vmatpush1.msra.mxu0 0.0
    %512 = vmatprep.subr.mxu0 0.0
    %513 = vmatpush1.msra.mxu0 0.0
    %514 = vmatprep.subr.mxu0 0.0
    %515 = vmatpush1.msra.mxu0 0.0
    %516 = vmatprep.subr.mxu0 0.0
    %517 = vmatpush1.msra.mxu0 0.0
    %518 = vmatprep.subr.mxu0 0.0
    %519 = vmatpush1.msra.mxu0 0.0
    %520 = vmatprep.subr.mxu0 0.0
    %521 = vmatpush1.msra.mxu0 0.0
    %522 = vmatprep.subr.mxu0 0.0
    %523 = vmatpush1.msra.mxu0 0.0
    %524 = vmatprep.subr.mxu0 0.0
    %525 = vmatpush1.msra.mxu0 0.0
    %526 = vmatprep.subr.mxu0 0.0
    %527 = vmatpush1.msra.mxu0 0.0
    %528 = vmatprep.subr.mxu0 0.0
    %529 = vmatpush1.msra.mxu0 0.0
    %530 = vmatprep.subr.mxu0 0.0
    %531 = vmatpush1.msra.mxu0 0.0
    %532 = vmatprep.subr.mxu0 0.0
    %533 = vmatpush1.msra.mxu0 0.0
    %534 = vmatprep.mubr.f32.mxu0 0.0
    %535 = vmatmul.mubr.f32.gmra.mrb[0].mxu0 %v468
    %v536 = vpop.f32.mrb[0].mxu0
    %v537 = vadd.f32 0.0, %v536
    %v538 = vpop.f32.mrb[0].mxu0
    %539 = vdwg.mxu0
    %v540 = vadd.f32 %v145, %v537
    %v541 = vmul.f32 %v540, 0.5
    %v542 = vtanh.pop %v541
    %v543 = vadd.f32 %v542, 1.0
    %v544 = vmul.f32 %v543, 0.5
    %v545 = vtanh.pop %v540
    %v546 = vmul.f32 %v544, %v458
    %548 = vrot.lane.b32.xlu0 %v545, 64
    %v549 = vpop.permute.xlu0 %548
    %v551 = vmul.f32 %v544, %v549
    %553 = vrot.lane.b32.xlu0 %v551, 32
    %v554 = vpop.permute.xlu0 %553
    %v556 = vadd.f32 %v546, %v554
    %v557 = vtanh.pop %v556
    %559 = vrot.lane.b32.xlu0 %v557, 64
    %v560 = vpop.permute.xlu0 %559
    %v562 = vmul.f32 %v544, %v560
    %564 = vrot.lane.b32.xlu0 %v562, 32
    %v565 = vpop.permute.xlu0 %564
    %v566 = vsel %vm172, %v565, 0
    %568 = vmatprep.subr.mxu0 0.0
    %569 = vmatpush1.msra.mxu0 %v168
    %570 = vmatprep.subr.mxu0 0.0
    %571 = vmatpush1.msra.mxu0 %v169
    %572 = vmatprep.subr.mxu0 0.0
    %573 = vmatpush1.msra.mxu0 %v170
    %574 = vmatprep.subr.mxu0 0.0
    %575 = vmatpush1.msra.mxu0 %v171
    %576 = vmatprep.subr.mxu0 0.0
    %577 = vmatpush1.msra.mxu0 0.0
    %578 = vmatprep.subr.mxu0 0.0
    %579 = vmatpush1.msra.mxu0 0.0
    %580 = vmatprep.subr.mxu0 0.0
    %581 = vmatpush1.msra.mxu0 0.0
    %582 = vmatprep.subr.mxu0 0.0
    %583 = vmatpush1.msra.mxu0 0.0
    %584 = vmatprep.subr.mxu0 0.0
    %585 = vmatpush1.msra.mxu0 0.0
    %586 = vmatprep.subr.mxu0 0.0
    %587 = vmatpush1.msra.mxu0 0.0
    %588 = vmatprep.subr.mxu0 0.0
    %589 = vmatpush1.msra.mxu0 0.0
    %590 = vmatprep.subr.mxu0 0.0
    %591 = vmatpush1.msra.mxu0 0.0
    %592 = vmatprep.subr.mxu0 0.0
    %593 = vmatpush1.msra.mxu0 0.0
    %594 = vmatprep.subr.mxu0 0.0
    %595 = vmatpush1.msra.mxu0 0.0
    %596 = vmatprep.subr.mxu0 0.0
    %597 = vmatpush1.msra.mxu0 0.0
    %598 = vmatprep.subr.mxu0 0.0
    %599 = vmatpush1.msra.mxu0 0.0
    %600 = vmatprep.subr.mxu0 0.0
    %601 = vmatpush1.msra.mxu0 0.0
    %602 = vmatprep.subr.mxu0 0.0
    %603 = vmatpush1.msra.mxu0 0.0
    %604 = vmatprep.subr.mxu0 0.0
    %605 = vmatpush1.msra.mxu0 0.0
    %606 = vmatprep.subr.mxu0 0.0
    %607 = vmatpush1.msra.mxu0 0.0
    %608 = vmatprep.subr.mxu0 0.0
    %609 = vmatpush1.msra.mxu0 0.0
    %610 = vmatprep.subr.mxu0 0.0
    %611 = vmatpush1.msra.mxu0 0.0
    %612 = vmatprep.subr.mxu0 0.0
    %613 = vmatpush1.msra.mxu0 0.0
    %614 = vmatprep.subr.mxu0 0.0
    %615 = vmatpush1.msra.mxu0 0.0
    %616 = vmatprep.subr.mxu0 0.0
    %617 = vmatpush1.msra.mxu0 0.0
    %618 = vmatprep.subr.mxu0 0.0
    %619 = vmatpush1.msra.mxu0 0.0
    %620 = vmatprep.subr.mxu0 0.0
    %621 = vmatpush1.msra.mxu0 0.0
    %622 = vmatprep.subr.mxu0 0.0
    %623 = vmatpush1.msra.mxu0 0.0
    %624 = vmatprep.subr.mxu0 0.0
    %625 = vmatpush1.msra.mxu0 0.0
    %626 = vmatprep.subr.mxu0 0.0
    %627 = vmatpush1.msra.mxu0 0.0
    %628 = vmatprep.subr.mxu0 0.0
    %629 = vmatpush1.msra.mxu0 0.0
    %630 = vmatprep.subr.mxu0 0.0
    %631 = vmatpush1.msra.mxu0 0.0
    %632 = vmatprep.mubr.f32.mxu0 0.0
    %633 = vmatmul.mubr.f32.gmra.mrb[0].mxu0 %v566
    %v634 = vpop.f32.mrb[0].mxu0
    %v635 = vadd.f32 0.0, %v634
    %v636 = vpop.f32.mrb[0].mxu0
    %637 = vdwg.mxu0
    %v638 = vadd.f32 %v150, %v635
    %v639 = vmul.f32 %v638, 0.5
    %v640 = vtanh.pop %v639
    %v641 = vadd.f32 %v640, 1.0
    %v642 = vmul.f32 %v641, 0.5
    %v643 = vtanh.pop %v638
    %v644 = vmul.f32 %v642, %v556
    %646 = vrot.lane.b32.xlu0 %v643, 64
    %v647 = vpop.permute.xlu0 %646
    %v649 = vmul.f32 %v642, %v647
    %651 = vrot.lane.b32.xlu0 %v649, 32
    %v652 = vpop.permute.xlu0 %651
    %v654 = vadd.f32 %v644, %v652
    %v655 = vtanh.pop %v654
    %657 = vrot.lane.b32.xlu0 %v655, 64
    %v658 = vpop.permute.xlu0 %657
    %v660 = vmul.f32 %v642, %v658
    %662 = vrot.lane.b32.xlu0 %v660, 32
    %v663 = vpop.permute.xlu0 %662
    %v664 = vsel %vm172, %v663, 0
    %666 = vmatprep.subr.mxu0 0.0
    %667 = vmatpush1.msra.mxu0 %v168
    %668 = vmatprep.subr.mxu0 0.0
    %669 = vmatpush1.msra.mxu0 %v169
    %670 = vmatprep.subr.mxu0 0.0
    %671 = vmatpush1.msra.mxu0 %v170
    %672 = vmatprep.subr.mxu0 0.0
    %673 = vmatpush1.msra.mxu0 %v171
    %674 = vmatprep.subr.mxu0 0.0
    %675 = vmatpush1.msra.mxu0 0.0
    %676 = vmatprep.subr.mxu0 0.0
    %677 = vmatpush1.msra.mxu0 0.0
    %678 = vmatprep.subr.mxu0 0.0
    %679 = vmatpush1.msra.mxu0 0.0
    %680 = vmatprep.subr.mxu0 0.0
    %681 = vmatpush1.msra.mxu0 0.0
    %682 = vmatprep.subr.mxu0 0.0
    %683 = vmatpush1.msra.mxu0 0.0
    %684 = vmatprep.subr.mxu0 0.0
    %685 = vmatpush1.msra.mxu0 0.0
    %686 = vmatprep.subr.mxu0 0.0
    %687 = vmatpush1.msra.mxu0 0.0
    %688 = vmatprep.subr.mxu0 0.0
    %689 = vmatpush1.msra.mxu0 0.0
    %690 = vmatprep.subr.mxu0 0.0
    %691 = vmatpush1.msra.mxu0 0.0
    %692 = vmatprep.subr.mxu0 0.0
    %693 = vmatpush1.msra.mxu0 0.0
    %694 = vmatprep.subr.mxu0 0.0
    %695 = vmatpush1.msra.mxu0 0.0
    %696 = vmatprep.subr.mxu0 0.0
    %697 = vmatpush1.msra.mxu0 0.0
    %698 = vmatprep.subr.mxu0 0.0
    %699 = vmatpush1.msra.mxu0 0.0
    %700 = vmatprep.subr.mxu0 0.0
    %701 = vmatpush1.msra.mxu0 0.0
    %702 = vmatprep.subr.mxu0 0.0
    %703 = vmatpush1.msra.mxu0 0.0
    %704 = vmatprep.subr.mxu0 0.0
    %705 = vmatpush1.msra.mxu0 0.0
    %706 = vmatprep.subr.mxu0 0.0
    %707 = vmatpush1.msra.mxu0 0.0
    %708 = vmatprep.subr.mxu0 0.0
    %709 = vmatpush1.msra.mxu0 0.0
    %710 = vmatprep.subr.mxu0 0.0
    %711 = vmatpush1.msra.mxu0 0.0
    %712 = vmatprep.subr.mxu0 0.0
    %713 = vmatpush1.msra.mxu0 0.0
    %714 = vmatprep.subr.mxu0 0.0
    %715 = vmatpush1.msra.mxu0 0.0
    %716 = vmatprep.subr.mxu0 0.0
    %717 = vmatpush1.msra.mxu0 0.0
    %718 = vmatprep.subr.mxu0 0.0
    %719 = vmatpush1.msra.mxu0 0.0
    %720 = vmatprep.subr.mxu0 0.0
    %721 = vmatpush1.msra.mxu0 0.0
    %722 = vmatprep.subr.mxu0 0.0
    %723 = vmatpush1.msra.mxu0 0.0
    %724 = vmatprep.subr.mxu0 0.0
    %725 = vmatpush1.msra.mxu0 0.0
    %726 = vmatprep.subr.mxu0 0.0
    %727 = vmatpush1.msra.mxu0 0.0
    %728 = vmatprep.subr.mxu0 0.0
    %729 = vmatpush1.msra.mxu0 0.0
    %730 = vmatprep.mubr.f32.mxu0 0.0
    %731 = vmatmul.mubr.f32.gmra.mrb[0].mxu0 %v664
    %v732 = vpop.f32.mrb[0].mxu0
    %v733 = vadd.f32 0.0, %v732
    %v734 = vpop.f32.mrb[0].mxu0
    %735 = vdwg.mxu0
    %v736 = vadd.f32 %v155, %v733
    %v737 = vmul.f32 %v736, 0.5
    %v738 = vtanh.pop %v737
    %v739 = vadd.f32 %v738, 1.0
    %v740 = vmul.f32 %v739, 0.5
    %v741 = vtanh.pop %v736
    %v742 = vmul.f32 %v740, %v654
    %744 = vrot.lane.b32.xlu0 %v741, 64
    %v745 = vpop.permute.xlu0 %744
    %v747 = vmul.f32 %v740, %v745
    %749 = vrot.lane.b32.xlu0 %v747, 32
    %v750 = vpop.permute.xlu0 %749
    %v752 = vadd.f32 %v742, %v750
    %v753 = vtanh.pop %v752
    %755 = vrot.lane.b32.xlu0 %v753, 64
    %v756 = vpop.permute.xlu0 %755
    %v758 = vmul.f32 %v740, %v756
    %760 = vrot.lane.b32.xlu0 %v758, 32
    %v761 = vpop.permute.xlu0 %760
    %v762 = vsel %vm172, %v761, 0
    %764 = vmatprep.subr.mxu0 0.0
    %765 = vmatpush1.msra.mxu0 %v168
    %766 = vmatprep.subr.mxu0 0.0
    %767 = vmatpush1.msra.mxu0 %v169
    %768 = vmatprep.subr.mxu0 0.0
    %769 = vmatpush1.msra.mxu0 %v170
    %770 = vmatprep.subr.mxu0 0.0
    %771 = vmatpush1.msra.mxu0 %v171
    %772 = vmatprep.subr.mxu0 0.0
    %773 = vmatpush1.msra.mxu0 0.0
    %774 = vmatprep.subr.mxu0 0.0
    %775 = vmatpush1.msra.mxu0 0.0
    %776 = vmatprep.subr.mxu0 0.0
    %777 = vmatpush1.msra.mxu0 0.0
    %778 = vmatprep.subr.mxu0 0.0
    %779 = vmatpush1.msra.mxu0 0.0
    %780 = vmatprep.subr.mxu0 0.0
    %781 = vmatpush1.msra.mxu0 0.0
    %782 = vmatprep.subr.mxu0 0.0
    %783 = vmatpush1.msra.mxu0 0.0
    %784 = vmatprep.subr.mxu0 0.0
    %785 = vmatpush1.msra.mxu0 0.0
    %786 = vmatprep.subr.mxu0 0.0
    %787 = vmatpush1.msra.mxu0 0.0
    %788 = vmatprep.subr.mxu0 0.0
    %789 = vmatpush1.msra.mxu0 0.0
    %790 = vmatprep.subr.mxu0 0.0
    %791 = vmatpush1.msra.mxu0 0.0
    %792 = vmatprep.subr.mxu0 0.0
    %793 = vmatpush1.msra.mxu0 0.0
    %794 = vmatprep.subr.mxu0 0.0
    %795 = vmatpush1.msra.mxu0 0.0
    %796 = vmatprep.subr.mxu0 0.0
    %797 = vmatpush1.msra.mxu0 0.0
    %798 = vmatprep.subr.mxu0 0.0
    %799 = vmatpush1.msra.mxu0 0.0
    %800 = vmatprep.subr.mxu0 0.0
    %801 = vmatpush1.msra.mxu0 0.0
    %802 = vmatprep.subr.mxu0 0.0
    %803 = vmatpush1.msra.mxu0 0.0
    %804 = vmatprep.subr.mxu0 0.0
    %805 = vmatpush1.msra.mxu0 0.0
    %806 = vmatprep.subr.mxu0 0.0
    %807 = vmatpush1.msra.mxu0 0.0
    %808 = vmatprep.subr.mxu0 0.0
    %809 = vmatpush1.msra.mxu0 0.0
    %810 = vmatprep.subr.mxu0 0.0
    %811 = vmatpush1.msra.mxu0 0.0
    %812 = vmatprep.subr.mxu0 0.0
    %813 = vmatpush1.msra.mxu0 0.0
    %814 = vmatprep.subr.mxu0 0.0
    %815 = vmatpush1.msra.mxu0 0.0
    %816 = vmatprep.subr.mxu0 0.0
    %817 = vmatpush1.msra.mxu0 0.0
    %818 = vmatprep.subr.mxu0 0.0
    %819 = vmatpush1.msra.mxu0 0.0
    %820 = vmatprep.subr.mxu0 0.0
    %821 = vmatpush1.msra.mxu0 0.0
    %822 = vmatprep.subr.mxu0 0.0
    %823 = vmatpush1.msra.mxu0 0.0
    %824 = vmatprep.subr.mxu0 0.0
    %825 = vmatpush1.msra.mxu0 0.0
    %826 = vmatprep.subr.mxu0 0.0
    %827 = vmatpush1.msra.mxu0 0.0
    %828 = vmatprep.mubr.f32.mxu0 0.0
    %829 = vmatmul.mubr.f32.gmra.mrb[0].mxu0 %v762
    %v830 = vpop.f32.mrb[0].mxu0
    %v831 = vadd.f32 0.0, %v830
    %v832 = vpop.f32.mrb[0].mxu0
    %833 = vdwg.mxu0
    %v834 = vadd.f32 %v160, %v831
    %v835 = vmul.f32 %v834, 0.5
    %v836 = vtanh.pop %v835
    %v837 = vadd.f32 %v836, 1.0
    %v838 = vmul.f32 %v837, 0.5
    %v839 = vtanh.pop %v834
    %v840 = vmul.f32 %v838, %v752
    %842 = vrot.lane.b32.xlu0 %v839, 64
    %v843 = vpop.permute.xlu0 %842
    %v845 = vmul.f32 %v838, %v843
    %847 = vrot.lane.b32.xlu0 %v845, 32
    %v848 = vpop.permute.xlu0 %847
    %v850 = vadd.f32 %v840, %v848
    %v851 = vtanh.pop %v850
    %853 = vrot.lane.b32.xlu0 %v851, 64
    %v854 = vpop.permute.xlu0 %853
    %v856 = vmul.f32 %v838, %v854
    %858 = vrot.lane.b32.xlu0 %v856, 32
    %v859 = vpop.permute.xlu0 %858
    %v860 = vsel %vm172, %v859, 0
    %862 = vmatprep.subr.mxu0 0.0
    %863 = vmatpush1.msra.mxu0 %v168
    %864 = vmatprep.subr.mxu0 0.0
    %865 = vmatpush1.msra.mxu0 %v169
    %866 = vmatprep.subr.mxu0 0.0
    %867 = vmatpush1.msra.mxu0 %v170
    %868 = vmatprep.subr.mxu0 0.0
    %869 = vmatpush1.msra.mxu0 %v171
    %870 = vmatprep.subr.mxu0 0.0
    %871 = vmatpush1.msra.mxu0 0.0
    %872 = vmatprep.subr.mxu0 0.0
    %873 = vmatpush1.msra.mxu0 0.0
    %874 = vmatprep.subr.mxu0 0.0
    %875 = vmatpush1.msra.mxu0 0.0
    %876 = vmatprep.subr.mxu0 0.0
    %877 = vmatpush1.msra.mxu0 0.0
    %878 = vmatprep.subr.mxu0 0.0
    %879 = vmatpush1.msra.mxu0 0.0
    %880 = vmatprep.subr.mxu0 0.0
    %881 = vmatpush1.msra.mxu0 0.0
    %882 = vmatprep.subr.mxu0 0.0
    %883 = vmatpush1.msra.mxu0 0.0
    %884 = vmatprep.subr.mxu0 0.0
    %885 = vmatpush1.msra.mxu0 0.0
    %886 = vmatprep.subr.mxu0 0.0
    %887 = vmatpush1.msra.mxu0 0.0
    %888 = vmatprep.subr.mxu0 0.0
    %889 = vmatpush1.msra.mxu0 0.0
    %890 = vmatprep.subr.mxu0 0.0
    %891 = vmatpush1.msra.mxu0 0.0
    %892 = vmatprep.subr.mxu0 0.0
    %893 = vmatpush1.msra.mxu0 0.0
    %894 = vmatprep.subr.mxu0 0.0
    %895 = vmatpush1.msra.mxu0 0.0
    %896 = vmatprep.subr.mxu0 0.0
    %897 = vmatpush1.msra.mxu0 0.0
    %898 = vmatprep.subr.mxu0 0.0
    %899 = vmatpush1.msra.mxu0 0.0
    %900 = vmatprep.subr.mxu0 0.0
    %901 = vmatpush1.msra.mxu0 0.0
    %902 = vmatprep.subr.mxu0 0.0
    %903 = vmatpush1.msra.mxu0 0.0
    %904 = vmatprep.subr.mxu0 0.0
    %905 = vmatpush1.msra.mxu0 0.0
    %906 = vmatprep.subr.mxu0 0.0
    %907 = vmatpush1.msra.mxu0 0.0
    %908 = vmatprep.subr.mxu0 0.0
    %909 = vmatpush1.msra.mxu0 0.0
    %910 = vmatprep.subr.mxu0 0.0
    %911 = vmatpush1.msra.mxu0 0.0
    %912 = vmatprep.subr.mxu0 0.0
    %913 = vmatpush1.msra.mxu0 0.0
    %914 = vmatprep.subr.mxu0 0.0
    %915 = vmatpush1.msra.mxu0 0.0
    %916 = vmatprep.subr.mxu0 0.0
    %917 = vmatpush1.msra.mxu0 0.0
    %918 = vmatprep.subr.mxu0 0.0
    %919 = vmatpush1.msra.mxu0 0.0
    %920 = vmatprep.subr.mxu0 0.0
    %921 = vmatpush1.msra.mxu0 0.0
    %922 = vmatprep.subr.mxu0 0.0
    %923 = vmatpush1.msra.mxu0 0.0
    %924 = vmatprep.subr.mxu0 0.0
    %925 = vmatpush1.msra.mxu0 0.0
    %926 = vmatprep.mubr.f32.mxu0 0.0
    %927 = vmatmul.mubr.f32.gmra.mrb[0].mxu0 %v860
    %v928 = vpop.f32.mrb[0].mxu0
    %v929 = vadd.f32 0.0, %v928
    %v930 = vpop.f32.mrb[0].mxu0
    %931 = vdwg.mxu0
    %v932 = vadd.f32 %v165, %v929
    %v933 = vmul.f32 %v932, 0.5
    %v934 = vtanh.pop %v933
    %v935 = vadd.f32 %v934, 1.0
    %v936 = vmul.f32 %v935, 0.5
    %v937 = vtanh.pop %v932
    %v938 = vmul.f32 %v936, %v850
    %940 = vrot.lane.b32.xlu0 %v937, 64
    %v941 = vpop.permute.xlu0 %940
    %v943 = vmul.f32 %v936, %v941
    %945 = vrot.lane.b32.xlu0 %v943, 32
    %v946 = vpop.permute.xlu0 %945
    %v948 = vadd.f32 %v938, %v946
    %v949 = vtanh.pop %v948
    %951 = vrot.lane.b32.xlu0 %v949, 64
    %v952 = vpop.permute.xlu0 %951
    %v954 = vmul.f32 %v936, %v952
    %956 = vrot.lane.b32.xlu0 %v366, 64
    %v957 = vpop.permute.xlu0 %956
    %959 = vrot.lane.b32.xlu0 %v464, 96
    %v960 = vpop.permute.xlu0 %959
    %963 = vrot.lane.b32.xlu0 %v758, 64
    %v964 = vpop.permute.xlu0 %963
    %966 = vrot.lane.b32.xlu0 %v856, 96
    %v967 = vpop.permute.xlu0 %966
    %v969 = vsel %vm172, %v271, %v957
    %vm970 = vcmask 523264
    %v971 = vsel %vm970, %v969, %v960
    %vm972 = vcmask 785408
    %v973 = vsel %vm972, %v971, %v562
    %v974 = vsel %vm172, %v663, %v964
    %v975 = vsel %vm970, %v974, %v967
    %v976 = vsel %vm972, %v975, %v954
    %977 = vst [vmem:[#allocation2] sm:$0xff] %v973
    %978 = vst [vmem:[#allocation2 + $0x8] sm:$0xff] %v976
    %980 = vrot.lane.b32.xlu0 %v948, 96
    %v981 = vpop.permute.xlu0 %980
    %983 = vst.msk [vmem:[#allocation4] sm:$0xff] %vm172, %v981
    // Predicated region
    $region18: #{tpu_custom_call.1} parent=1 // pred_check
      _
    $region19: #{tpu_custom_call.1} parent=1 // pred_check_branch
      %985 = sbr.rel (0) target = $region21
    $region20: #{tpu_custom_call.1} parent=1 // pred_region
      %s987 = ssub.s32 256, 256
      %988 = vsyncadd [#allocation3], %s987
      %s990 = sshll.u32 [#allocation2], 4
      %s991 = int_to_ptr.vmem [resolvable:$true] %s990
      %993 = dma.vmem_to_hbm [thread:$0]  %s991, 256, %s4, [#allocation3]
    $region21: #{tpu_custom_call.1} parent=1 // pred_fallthru
      _
    // Predicated region
    $region22: #{tpu_custom_call.1} parent=1 // pred_check
      _
    $region23: #{tpu_custom_call.1} parent=1 // pred_check_branch
      %995 = sbr.rel (0) target = $region25
    $region24: #{tpu_custom_call.1} parent=1 // pred_region
      %s997 = ssub.s32 128, 128
      %998 = vsyncadd [#allocation5], %s997
      %s1000 = sshll.u32 [#allocation4], 4
      %s1001 = int_to_ptr.vmem [resolvable:$true] %s1000
      %1003 = dma.vmem_to_hbm [thread:$0]  %s1001, 128, %s5, [#allocation5]
    $region25: #{tpu_custom_call.1} parent=1 // pred_fallthru
      _
    // Predicated region
    $region26: #{tpu_custom_call.1} parent=1 // pred_check
      _
    $region27: #{tpu_custom_call.1} parent=1 // pred_check_branch
      %1005 = sbr.rel (0) target = $region29
    $region28: #{tpu_custom_call.1} parent=1 // pred_region
      %1006 = dma.done [#allocation3], 256
    $region29: #{tpu_custom_call.1} parent=1 // pred_fallthru
      _
    // Predicated region
    $region30: #{tpu_custom_call.1} parent=1 // pred_check
      _
    $region31: #{tpu_custom_call.1} parent=1 // pred_check_branch
      %1008 = sbr.rel (0) target = $region33
    $region32: #{tpu_custom_call.1} parent=1 // pred_region
      %1009 = dma.done [#allocation5], 128
    $region33: #{tpu_custom_call.1} parent=1 // pred_fallthru
      _
    %1010 = vsyncpa [#allocation3], 1
    %1011 = vsyncpa [#allocation5], 1

</llo_original>
